<compile_context>
chip_gen: v7x
topology: tpu7x:2x2x1
jax: 0.10.0
libtpu: 0.0.40
codegen_flags: <defaults>
</compile_context>

<pallas_src>
import jax
import jax.numpy as jnp
from jax.experimental import pallas as pl
from jax.experimental.pallas import tpu as pltpu

LANE = 128
_TARGET_BLOCK_BYTES = 4 * 1024 * 1024   # ~4 MiB/block; 4 buffers (2 in + 2 out) = 16 MiB
_VMEM_LIMIT_BYTES = 32 * 1024 * 1024    # raise v5e's 16 MiB scoped default; == v6e/v7x default
_SPLIT_BYTES = 1 * 1024 * 1024          # above this, force >=2 grid steps (2 TCs + pipelining)
_MIN_PALLAS_BYTES = 64 * 1024           # below this, plain XLA elementwise wins


def _relu_kernel(x_ref, o_ref):
    # Elementwise ReLU on the current VMEM tile (VPU path, mem-bound).
    o_ref[...] = jnp.maximum(x_ref[...], jnp.zeros((), dtype=x_ref.dtype))


def _round_up(x: int, m: int) -> int:
    return -(-x // m) * m


def relu_random_forward(x: jax.Array, *, min_pallas_bytes: int = _MIN_PALLAS_BYTES) -> jax.Array:
    """Forward of ReLURandom: elementwise max(x, 0), any shape/dtype."""
    orig_shape = x.shape
    orig_dtype = x.dtype
    total = x.size
    itemsize = jnp.dtype(orig_dtype).itemsize
    nbytes = total * itemsize

    if total == 0:
        return x
    if nbytes < min_pallas_bytes:
        # Tiny tensors: pallas_call fixed overhead (grid setup, ~0.35 us/step,
        # wrapper reshapes) dominates and XLA can fuse this into neighbors.
        return jnp.maximum(x, jnp.zeros((), dtype=orig_dtype))

    # dtype-aware sublane packing: 8 (4-byte), 16 (2-byte), 32 (1-byte).
    sublane = max(8, 32 // itemsize)

    rows = -(-total // LANE)        # rows of 128 lanes needed to hold all elements
    padded = rows * LANE

    # ~4 MiB of rows per block, aligned to sublane packing.
    target_rows = max(
        sublane, ((_TARGET_BLOCK_BYTES // (LANE * itemsize)) // sublane) * sublane
    )

    if rows <= target_rows:
        if nbytes > _SPLIT_BYTES and rows >= 2 * sublane:
            # >=2 grid steps: shards across both v7x TensorCores and restores
            # DMA pipelining (prefetch of block i+1 overlaps writeback of i).
            tile_rows = _round_up(-(-rows // 2), sublane)
        else:
            tile_rows = rows        # block_shape == full array dims (always legal)
    else:
        tile_rows = target_rows     # big aligned tile; last block may be partial

    grid = (pl.cdiv(rows, tile_rows),)   # partial last block: OOB writes are masked

    x_flat = jnp.reshape(x, (total,))
    if padded != total:
        # TODO(synk): truly ragged tails (total % 128 != 0) could be handled
        # in-kernel (memory_space=pl.ANY + manual DMA + masked store) to avoid
        # this pad/slice pass; 128-aligned shapes never hit this branch now.
        x_flat = jnp.pad(x_flat, (0, padded - total))
    x2d = jnp.reshape(x_flat, (rows, LANE))

    out2d = pl.pallas_call(
        _relu_kernel,
        out_shape=jax.ShapeDtypeStruct((rows, LANE), orig_dtype),
        grid_spec=pltpu.PrefetchScalarGridSpec(
            num_scalar_prefetch=0,
            grid=grid,
            in_specs=[pl.BlockSpec((tile_rows, LANE), lambda i: (i, 0))],
            out_specs=pl.BlockSpec((tile_rows, LANE), lambda i: (i, 0)),
        ),
        compiler_params=pltpu.CompilerParams(
            dimension_semantics=("parallel",),
            vmem_limit_bytes=_VMEM_LIMIT_BYTES,
        ),
        cost_estimate=pl.CostEstimate(
            flops=total,
            transcendentals=0,
            bytes_accessed=2 * total * itemsize),
    )(x2d)

    out_flat = jnp.reshape(out2d, (padded,))
    if padded != total:
        out_flat = out_flat[:total]
    return jnp.reshape(out_flat, orig_shape)


if __name__ == "__main__":
    key = jax.random.PRNGKey(0)
    k1, k2, k3 = jax.random.split(key, 3)

    # 1) Small NCHW activation tensor (the module's typical input). At this
    #    size the wrapper normally bypasses pallas; force the Pallas path once
    #    to exercise the kernel, and also check the bypass path.
    x_small = jax.random.normal(k1, (2, 4, 16, 16), dtype=jnp.float32)
    out_pallas = jax.block_until_ready(relu_random_forward(x_small, min_pallas_bytes=0))
    out_bypass = jax.block_until_ready(relu_random_forward(x_small))
    ref_small = jnp.maximum(x_small, 0.0)
    assert out_pallas.shape == x_small.shape and out_pallas.dtype == x_small.dtype
    assert jnp.array_equal(out_pallas, ref_small), "mismatch (pallas path)"
    assert jnp.array_equal(out_bypass, ref_small), "mismatch (bypass path)"

    # 2) Ragged element count (total % 128 != 0), forced through the kernel.
    x_ragged = jax.random.normal(k2, (3, 5, 7, 11), dtype=jnp.float32)
    out_ragged = jax.block_until_ready(relu_random_forward(x_ragged, min_pallas_bytes=0))
    assert jnp.array_equal(out_ragged, jnp.maximum(x_ragged, 0.0)), "mismatch (ragged)"

    # 3) Medium tensor (2 MiB): default path -> 2-step "parallel" grid.
    x_med = jax.random.normal(k3, (8, 16, 64, 64), dtype=jnp.float32)
    out_med = jax.block_until_ready(relu_random_forward(x_med))
    assert jnp.array_equal(out_med, jnp.maximum(x_med, 0.0)), "mismatch (medium)"

    print("KERNEL_OK")
</pallas_src>

<mosaic_0001>
module attributes {stable_mosaic.version = 11 : i64} {
  func.func @_relu_kernel(%arg0: i32, %arg1: memref<16x128xf32, #tpu.memory_space<vmem>>, %arg2: memref<16x128xf32, #tpu.memory_space<vmem>>) attributes {dimension_semantics = [#tpu.dimension_semantics<parallel>], iteration_bounds = array<i64: 1>, scalar_prefetch = 0 : i64, scratch_operands = 0 : i64, tpu.core_type = #tpu.core_type<tc>, window_params = [{transform_indices = @transform_0, window_bounds = array<i64: 16, 128>}, {transform_indices = @transform_1, window_bounds = array<i64: 16, 128>}]} {
    %c0 = arith.constant 0 : index
    %c0_0 = arith.constant 0 : index
    %0 = vector.load %arg1[%c0, %c0_0] : memref<16x128xf32, #tpu.memory_space<vmem>>, vector<16x128xf32>
    %cst = arith.constant 0.000000e+00 : f32
    %1 = vector.broadcast %cst : f32 to vector<16x128xf32>
    %2 = arith.maximumf %0, %1 : vector<16x128xf32>
    %c0_1 = arith.constant 0 : index
    %c0_2 = arith.constant 0 : index
    %3 = vector.load %arg2[%c0_1, %c0_2] : memref<16x128xf32, #tpu.memory_space<vmem>>, vector<16x128xf32>
    tpu.vector_store %arg2[%c0_1, %c0_2], %2 {strides = array<i32>} : memref<16x128xf32, #tpu.memory_space<vmem>>, vector<16x128xf32>,
    return
  }
  func.func @transform_0(%arg0: i32) -> (i32, i32) {
    %c0_i32 = arith.constant 0 : i32
    %c0_i32_0 = arith.constant 0 : i32
    return %arg0, %c0_i32 : i32, i32
  }
  func.func @transform_1(%arg0: i32) -> (i32, i32) {
    %c0_i32 = arith.constant 0 : i32
    %c0_i32_0 = arith.constant 0 : i32
    return %arg0, %c0_i32 : i32, i32
  }
}

</mosaic_0001>

<llo_original>
// kernel: tpu_custom_call.1
$region0: #{tpu_custom_call.1}
  #allocation0 [shape = 'u32[]', space=smem, size = 0x4, offset = 0x4, fixed_abs, tag = 'smem constant byte address 0x4 - core index']
  #allocation1 [shape = 'u32[144,128]{1,0:T(1,128)}', space=vmem, size = 0x12000, scoped, tag = 'internal scratch']
  %s0 = inlined_call_operand.hbm [shape: f32[16,128], index: 0, kind: input, shape index: {}]
  %s1 = inlined_call_operand.hbm [shape: f32[16,128], index: 1, kind: output, shape index: {}]
  %s2 = sld [smem:[#allocation0]]
  $region18: #{tpu_custom_call.1} parent=0
    _
  %s4 = ssub.s32 1, %s2
  %s5 = scalar_select 0, %s4, %s2
  $region1: #{tpu_custom_call.1} parent=0
    #allocation2 [shape = 'u8[8192]{0}', space=vmem, size = 0x2000, scoped, tag = 'input window, operand 0, single buffered']
    #allocation3 [shape = 's32[1]{0}', space=sflag, size = 0x4, scoped, tag = 'scoped memory for tpu_custom_call.1']
    #allocation4 [shape = 's32[1]{0}', space=sflag, size = 0x4, scoped, tag = 'scoped memory for tpu_custom_call.1']
    #allocation5 [shape = 'u8[8192]{0}', space=vmem, size = 0x2000, scoped, tag = 'output window, operand 0, single buffered']
    %6 = vsyncpa [#allocation3], 0
    %7 = vsyncpa [#allocation4], 0
    // Predicated region
    $region2: #{tpu_custom_call.1} parent=1 // pred_check
      _
    $region3: #{tpu_custom_call.1} parent=1 // pred_check_branch
      %9 = sbr.rel (0) target = $region5
    $region4: #{tpu_custom_call.1} parent=1 // pred_region
      %s11 = ssub.s32 256, 256
      %12 = vsyncadd [#allocation3], %s11
      %s13 = sshll.u32 [#allocation2], 4
      %s14 = int_to_ptr.vmem [resolvable:$true] %s13
      %19 = dma.hbm_to_vmem [thread:$0]  %s0, 256, %s14, [#allocation3], 128, 128, 8
    $region5: #{tpu_custom_call.1} parent=1 // pred_fallthru
      _
    // Predicated region
    $region6: #{tpu_custom_call.1} parent=1 // pred_check
      _
    $region7: #{tpu_custom_call.1} parent=1 // pred_check_branch
      %21 = sbr.rel (0) target = $region9
    $region8: #{tpu_custom_call.1} parent=1 // pred_region
      %22 = dma.done [#allocation3], 256
    $region9: #{tpu_custom_call.1} parent=1 // pred_fallthru
      _
    %v23 = vld [vmem:[#allocation2] sm:$0xff]
    %v24 = vld [vmem:[#allocation2 + $0x8] sm:$0xff]
    %v25 = vmax.f32 %v23, 0.0
    %v26 = vmax.f32 %v24, 0.0
    %27 = vst [vmem:[#allocation5] sm:$0xff] %v25
    %28 = vst [vmem:[#allocation5 + $0x8] sm:$0xff] %v26
    // Predicated region
    $region10: #{tpu_custom_call.1} parent=1 // pred_check
      _
    $region11: #{tpu_custom_call.1} parent=1 // pred_check_branch
      %30 = sbr.rel (0) target = $region13
    $region12: #{tpu_custom_call.1} parent=1 // pred_region
      %s32 = ssub.s32 256, 256
      %33 = vsyncadd [#allocation4], %s32
      %s34 = sshll.u32 [#allocation5], 4
      %s35 = int_to_ptr.vmem [resolvable:$true] %s34
      %40 = dma.vmem_to_hbm [thread:$0]  %s35, 256, %s1, [#allocation4], 128, 128, 8
    $region13: #{tpu_custom_call.1} parent=1 // pred_fallthru
      _
    // Predicated region
    $region14: #{tpu_custom_call.1} parent=1 // pred_check
      _
    $region15: #{tpu_custom_call.1} parent=1 // pred_check_branch
      %42 = sbr.rel (0) target = $region17
    $region16: #{tpu_custom_call.1} parent=1 // pred_region
      %43 = dma.done [#allocation4], 256
    $region17: #{tpu_custom_call.1} parent=1 // pred_fallthru
      _
    %44 = vsyncpa [#allocation3], 1
    %45 = vsyncpa [#allocation4], 1

</llo_original>
